<compile_context>
chip_gen: v7x
topology: tpu7x:2x2x1
jax: 0.10.0
libtpu: 0.0.40
codegen_flags: <defaults>
</compile_context>

<pallas_src>
import jax
import jax.numpy as jnp
from jax import lax
from jax.experimental import pallas as pl
from jax.experimental.pallas import tpu as pltpu


# ----------------------------- config (synthetic) -----------------------------
class Config:
    model = "bert"
    vocab_size = 256          # small synthetic vocab
    embedding_dim = 128       # hidden size H (lane-aligned)
    prompt_len = 4
    prompt_num = 3            # prompt_lens = 12
    prompt_token_ids = 5
    mask_token_ids = 103
    h_ids = 30
    t_ids = 31
    prompt_init = 1
    pattern = "marker"
    tune = "prompt"


def _round_up(x, m):
    return ((x + m - 1) // m) * m


# ----------------------------- Pallas kernels ---------------------------------
def _encoder_kernel(x_ref, w_ref, b_ref, o_ref):
    # tanh(X @ W + b) : stand-in for the transformer encoder's token transform.
    # x_ref / w_ref are bf16 (MXU operands); accumulate in f32, epilogue in f32
    # (v5e VPU/EUP have no bf16 path, and the f32 accumulator is free).
    acc = jnp.dot(x_ref[...], w_ref[...], preferred_element_type=jnp.float32)
    o_ref[...] = jnp.tanh(acc + b_ref[...])


def encoder_forward(x_flat, w, b, *, tile_rows=None):
    """x_flat: [N, H] f32, w: [H, H] f32, b: [H] f32 -> [N, H] f32."""
    N, H = x_flat.shape
    if tile_rows is None:
        # Fill the MXU: >=128 rows per step; bf16 needs tile_rows % 16 == 0.
        tile_rows = 256 if N >= 256 else 128
    n_pad = _round_up(N, tile_rows)
    if n_pad != N:
        x_flat = jnp.pad(x_flat, ((0, n_pad - N), (0, 0)))
    x_bf = x_flat.astype(jnp.bfloat16)
    w_bf = w.astype(jnp.bfloat16)

    flops = 2 * n_pad * H * H
    bytes_accessed = (n_pad * H * 2) + (H * H * 2) + (H * 4) + (n_pad * H * 4)

    out = pl.pallas_call(
        _encoder_kernel,
        out_shape=jax.ShapeDtypeStruct((n_pad, H), jnp.float32),
        grid=(n_pad // tile_rows,),
        in_specs=[
            pl.BlockSpec((tile_rows, H), lambda i: (i, 0)),
            # Constant block index -> W/b stay resident in VMEM across steps
            # (Pallas skips the re-DMA when the block index is unchanged).
            pl.BlockSpec((H, H), lambda i: (0, 0)),
            pl.BlockSpec((1, H), lambda i: (0, 0)),
        ],
        out_specs=pl.BlockSpec((tile_rows, H), lambda i: (i, 0)),
        compiler_params=pltpu.CompilerParams(
            dimension_semantics=("parallel",)),   # independent row tiles; v7x 2-TC shard
        cost_estimate=pl.CostEstimate(
            flops=flops, transcendentals=n_pad * H, bytes_accessed=bytes_accessed),
    )(x_bf, w_bf, b.reshape(1, H))
    return out[:N]


def _info_nce_kernel(v_ref, w_ref, b_ref, c_ref, o_ref, acc_ref):
    # out = (V @ W.T + b) @ C.T, K-tiled over the vocab contraction axis.
    k = pl.program_id(0)

    @pl.when(k == 0)
    def _():
        acc_ref[...] = jnp.zeros_like(acc_ref)

    # proj_partial[b, h] += sum_k V[b, k] * W[h, k]   (torch Linear layout, no transpose)
    acc_ref[...] += lax.dot_general(
        v_ref[...], w_ref[...],
        dimension_numbers=(((1,), (1,)), ((), ())),
        preferred_element_type=jnp.float32,
    )

    @pl.when(k == pl.num_programs(0) - 1)
    def _():
        proj = acc_ref[...] + b_ref[...]
        o_ref[...] = lax.dot_general(
            proj, c_ref[...],
            dimension_numbers=(((1,), (1,)), ((), ())),
            preferred_element_type=jnp.float32,
        )


def info_nce_f(V, C, fc_w, fc_b):
    """V: [B, vocab], C: [B, H], fc_w: [H, vocab] (torch Linear weight), fc_b: [H].

    Returns [B, B] = Linear(V) @ C.T .
    """
    B, vocab = V.shape
    H = C.shape[1]

    # Lane-dense, sublane-aligned padded problem; slice back at the end.
    bm_pad = _round_up(max(B, 8), 8)        # sublane rows for V / output rows
    bn_pad = _round_up(max(B, 128), 128)    # lane-dense output columns (C rows)
    tk = min(2048, _round_up(vocab, 128))   # vocab (contraction) tile
    vocab_pad = _round_up(vocab, tk)

    V_p = jnp.pad(V, ((0, bm_pad - B), (0, vocab_pad - vocab)))
    W_p = jnp.pad(fc_w, ((0, 0), (0, vocab_pad - vocab)))
    C_p = jnp.pad(C, ((0, bn_pad - B), (0, 0)))

    # Per-step VMEM (double-buffered inputs + resident blocks + scratch + out).
    vmem_bytes = 4 * (2 * bm_pad * tk + 2 * H * tk + 2 * bn_pad * H + 2 * H
                      + 2 * bm_pad * bn_pad + bm_pad * H) + (1 << 20)
    vmem_limit = min(max(vmem_bytes, 16 << 20), 48 << 20)   # stays under v7x 64 MiB

    out = pl.pallas_call(
        _info_nce_kernel,
        out_shape=jax.ShapeDtypeStruct((bm_pad, bn_pad), jnp.float32),
        grid=(vocab_pad // tk,),
        in_specs=[
            pl.BlockSpec((bm_pad, tk), lambda k: (0, k)),
            pl.BlockSpec((H, tk), lambda k: (0, k)),
            pl.BlockSpec((1, H), lambda k: (0, 0)),
            pl.BlockSpec((bn_pad, H), lambda k: (0, 0)),
        ],
        out_specs=pl.BlockSpec((bm_pad, bn_pad), lambda k: (0, 0)),
        scratch_shapes=[pltpu.VMEM((bm_pad, H), jnp.float32)],
        compiler_params=pltpu.CompilerParams(
            dimension_semantics=("arbitrary",),       # K reduction carries accumulator
            vmem_limit_bytes=vmem_limit),
    )(V_p, W_p, fc_b.reshape(1, H), C_p)
    return out[:B, :B]


# ----------------------------- model (glue in JAX) -----------------------------
class EncodingModelPallas:
    def __init__(self, config, key):
        self.config = config
        H = config.embedding_dim
        V = config.vocab_size
        k = jax.random.split(key, 5)

        # bert word embedding (deterministic synthetic)
        self.word_embedding = 0.02 * jax.random.normal(k[0], (V, H), jnp.float32)

        self.prompt_lens = config.prompt_len * config.prompt_num
        self.prompt_ids = jnp.arange(self.prompt_lens, dtype=jnp.int32)

        # _init_prompt, prompt_init == 1: every prompt row := word_embedding[2003]
        init_row = self.word_embedding[2003 % V]
        self.softprompt = jnp.tile(init_row[None, :], (self.prompt_lens, 1))

        # info_nce_fc: nn.Linear(vocab_size, embedding_dim) — torch layout [H, vocab].
        self.fc_w = 0.02 * jax.random.normal(k[1], (H, V), jnp.float32)
        self.fc_b = 0.02 * jax.random.normal(k[2], (H,), jnp.float32)

        # TODO(synk): pretrained BertModel/RobertaModel encoder and BertForMaskedLM
        # lm_head cannot be loaded in-script; stand-in dense+tanh token encoder
        # (attention_mask unused by the stand-in).
        self.enc_w = 0.02 * jax.random.normal(k[3], (H, H), jnp.float32)
        self.enc_b = 0.02 * jax.random.normal(k[4], (H,), jnp.float32)

    # ---- embedding_input: replace prompt-token positions with soft prompts ----
    def embedding_input(self, input_ids):
        inp = self.word_embedding[input_ids]                       # [B, S, H]
        is_prompt = input_ids == self.config.prompt_token_ids      # [B, S]
        # p counter resets per batch row, increments per prompt token encountered
        p_idx = jnp.cumsum(is_prompt.astype(jnp.int32), axis=1) - 1
        p_idx = jnp.clip(p_idx, 0, self.prompt_lens - 1)
        prompt_rows = self.softprompt[self.prompt_ids][p_idx]      # [B, S, H]
        return jnp.where(is_prompt[..., None], prompt_rows, inp)

    def _encode(self, input_embedding):
        B, S, H = input_embedding.shape
        out_flat = encoder_forward(
            input_embedding.reshape(B * S, H), self.enc_w, self.enc_b
        )
        return out_flat.reshape(B, S, H)

    def infoNCE_f(self, V, C):
        return info_nce_f(V, C, self.fc_w, self.fc_b)

    def forward(self, inputs):
        ids = inputs["ids"]
        B, S = ids.shape
        pattern = self.config.pattern

        if pattern in ("softprompt", "hybridprompt"):
            input_embedding = self.embedding_input(ids)
        else:
            input_embedding = self.word_embedding[ids]
        outputs_words = self._encode(input_embedding)              # [B, S, H]

        batch_range = jnp.arange(B)
        if pattern in ("cls", "softprompt"):
            return outputs_words[batch_range, jnp.zeros((B,), jnp.int32)]
        elif pattern in ("hardprompt", "hybridprompt"):
            # argmax over bool gives 0 when not found == torch try/except fallback
            mask_pos = jnp.argmax(ids == self.config.mask_token_ids, axis=1)
            mask_hidden = outputs_words[batch_range, mask_pos]
            # TODO(synk): lm_head (pretrained MLM cls head) not reproducible in-script.
            return mask_hidden, None
        elif pattern == "marker":
            # argmax-over-bool == 0 fallback when the marker token is absent,
            # matching the torch np.argwhere try/except behaviour.
            h_pos = jnp.argmax(ids == self.config.h_ids, axis=1)
            t_pos = jnp.argmax(ids == self.config.t_ids, axis=1)
            h_state = outputs_words[batch_range, h_pos]
            t_state = outputs_words[batch_range, t_pos]
            # Tiny elementwise op: let XLA fuse it with the gathers (no pallas_call).
            return (h_state + t_state) * 0.5
        else:
            raise ValueError(pattern)


# ----------------------------- demo -------------------------------------------
if __name__ == "__main__":
    cfg = Config()
    key = jax.random.PRNGKey(0)
    k_model, k_ids, k_v = jax.random.split(key, 3)

    B, S = 2, 16
    model = EncodingModelPallas(cfg, k_model)

    # deterministic token ids with entity markers present
    ids = jax.random.randint(k_ids, (B, S), 10, 200, dtype=jnp.int32)
    ids = ids.at[0, 3].set(cfg.h_ids).at[0, 7].set(cfg.t_ids)
    ids = ids.at[1, 2].set(cfg.h_ids).at[1, 9].set(cfg.t_ids)
    mask = jnp.ones((B, S), dtype=jnp.int32)
    inputs = {"ids": ids, "mask": mask}

    # marker-pattern forward (hot path: Pallas bf16 encoder matmul, fused marker avg)
    cfg.pattern = "marker"
    reps = model.forward(inputs)                  # [B, H]
    reps = jax.block_until_ready(reps)

    # softprompt pattern exercises embedding_input + cls gather
    cfg.pattern = "softprompt"
    ids_sp = ids.at[0, 1].set(cfg.prompt_token_ids).at[1, 4].set(cfg.prompt_token_ids)
    cls_reps = model.forward({"ids": ids_sp, "mask": mask})
    cls_reps = jax.block_until_ready(cls_reps)

    # infoNCE_f: K-tiled Linear(vocab->H) + similarity matmul Pallas kernel
    V = jax.random.normal(k_v, (B, cfg.vocab_size), jnp.float32)
    nce = jax.block_until_ready(model.infoNCE_f(V, reps))

    # reference check for infoNCE (pure jnp)
    nce_ref = (V @ model.fc_w.T + model.fc_b) @ reps.T
    assert bool(jnp.allclose(nce, nce_ref, atol=1e-3, rtol=1e-3))

    assert reps.shape == (B, cfg.embedding_dim)
    assert cls_reps.shape == (B, cfg.embedding_dim)
    assert nce.shape == (B, B)
    assert bool(jnp.all(jnp.isfinite(reps)))
    assert bool(jnp.all(jnp.isfinite(cls_reps)))
    assert bool(jnp.all(jnp.isfinite(nce)))
    print("KERNEL_OK")
</pallas_src>

<mosaic_0001>
module attributes {stable_mosaic.version = 11 : i64} {
  func.func @_encoder_kernel(%arg0: i32, %arg1: memref<128x128xbf16, #tpu.memory_space<vmem>>, %arg2: memref<128x128xbf16, #tpu.memory_space<vmem>>, %arg3: memref<1x128xf32, #tpu.memory_space<vmem>>, %arg4: memref<128x128xf32, #tpu.memory_space<vmem>>) attributes {dimension_semantics = [#tpu.dimension_semantics<parallel>], iteration_bounds = array<i64: 1>, scalar_prefetch = 0 : i64, scratch_operands = 0 : i64, tpu.core_type = #tpu.core_type<tc>, window_params = [{transform_indices = @transform_0, window_bounds = array<i64: 128, 128>}, {pipeline_mode = #tpu.pipeline_mode<synchronous>, transform_indices = @transform_1, window_bounds = array<i64: 128, 128>}, {pipeline_mode = #tpu.pipeline_mode<synchronous>, transform_indices = @transform_2, window_bounds = array<i64: 1, 128>}, {transform_indices = @transform_3, window_bounds = array<i64: 128, 128>}]} {
    %c0 = arith.constant 0 : index
    %c0_0 = arith.constant 0 : index
    %0 = vector.load %arg1[%c0, %c0_0] : memref<128x128xbf16, #tpu.memory_space<vmem>>, vector<128x128xbf16>
    %c0_1 = arith.constant 0 : index
    %c0_2 = arith.constant 0 : index
    %1 = vector.load %arg2[%c0_1, %c0_2] : memref<128x128xbf16, #tpu.memory_space<vmem>>, vector<128x128xbf16>
    %cst = arith.constant dense<0.000000e+00> : vector<128x128xf32>
    %2 = tpu.matmul %0, %1, %cst {dimension_numbers = #tpu.dot_dimension_numbers<[1], [0], [0], [1], [0, 0, 1, 1], [], []>} : vector<128x128xbf16>, vector<128x128xbf16>, vector<128x128xf32> -> vector<128x128xf32>
    %c0_3 = arith.constant 0 : index
    %c0_4 = arith.constant 0 : index
    %3 = vector.load %arg3[%c0_3, %c0_4] : memref<1x128xf32, #tpu.memory_space<vmem>>, vector<1x128xf32>
    %4 = vector.broadcast %3 : vector<1x128xf32> to vector<128x128xf32>
    %5 = arith.addf %2, %4 : vector<128x128xf32>
    %6 = math.tanh %5 : vector<128x128xf32>
    %c0_5 = arith.constant 0 : index
    %c0_6 = arith.constant 0 : index
    %7 = vector.load %arg4[%c0_5, %c0_6] : memref<128x128xf32, #tpu.memory_space<vmem>>, vector<128x128xf32>
    tpu.vector_store %arg4[%c0_5, %c0_6], %6 {strides = array<i32>} : memref<128x128xf32, #tpu.memory_space<vmem>>, vector<128x128xf32>,
    return
  }
  func.func @transform_0(%arg0: i32) -> (i32, i32) {
    %c0_i32 = arith.constant 0 : i32
    %c0_i32_0 = arith.constant 0 : i32
    return %arg0, %c0_i32 : i32, i32
  }
  func.func @transform_1(%arg0: i32) -> (i32, i32) {
    %c0_i32 = arith.constant 0 : i32
    %c0_i32_0 = arith.constant 0 : i32
    %c0_i32_1 = arith.constant 0 : i32
    return %c0_i32, %c0_i32_0 : i32, i32
  }
  func.func @transform_2(%arg0: i32) -> (i32, i32) {
    %c0_i32 = arith.constant 0 : i32
    %c0_i32_0 = arith.constant 0 : i32
    %c0_i32_1 = arith.constant 0 : i32
    return %c0_i32, %c0_i32_0 : i32, i32
  }
  func.func @transform_3(%arg0: i32) -> (i32, i32) {
    %c0_i32 = arith.constant 0 : i32
    %c0_i32_0 = arith.constant 0 : i32
    return %arg0, %c0_i32 : i32, i32
  }
}

</mosaic_0001>

<llo_original>
// kernel: tpu_custom_call.1
$region0: #{tpu_custom_call.1}
  #allocation0 [shape = 'u32[]', space=smem, size = 0x4, offset = 0x4, fixed_abs, tag = 'smem constant byte address 0x4 - core index']
  #allocation1 [shape = 'u32[144,128]{1,0:T(1,128)}', space=vmem, size = 0x12000, scoped, tag = 'internal scratch']
  %s0 = inlined_call_operand.hbm [shape: bf16[128,128], index: 0, kind: input, shape index: {}]
  %s1 = inlined_call_operand.hbm [shape: bf16[128,128], index: 1, kind: input, shape index: {}]
  %s2 = inlined_call_operand.vmem [shape: f32[1,128], index: 2, kind: input, shape index: {}]
  %s3 = inlined_call_operand.hbm [shape: f32[128,128], index: 3, kind: output, shape index: {}]
  %s4 = sld [smem:[#allocation0]]
  $region30: #{tpu_custom_call.1} parent=0
    _
  %s6 = ssub.s32 1, %s4
  %s7 = scalar_select 0, %s6, %s4
  $region1: #{tpu_custom_call.1} parent=0
    #allocation2 [shape = 'u8[32768]{0}', space=vmem, size = 0x8000, scoped, tag = 'input window, operand 0, single buffered']
    #allocation3 [shape = 's32[1]{0}', space=sflag, size = 0x4, scoped, tag = 'scoped memory for tpu_custom_call.1']
    #allocation4 [shape = 's32[1]{0}', space=sflag, size = 0x4, scoped, tag = 'scoped memory for tpu_custom_call.1']
    #allocation5 [shape = 'u8[32768]{0}', space=vmem, size = 0x8000, scoped, tag = 'input window, operand 1, single buffered']
    #allocation6 [shape = 's32[1]{0}', space=sflag, size = 0x4, scoped, tag = 'scoped memory for tpu_custom_call.1']
    #allocation7 [shape = 'u8[65536]{0}', space=vmem, size = 0x10000, scoped, tag = 'output window, operand 0, single buffered']
    %8 = vsyncpa [#allocation3], 0
    %9 = vsyncpa [#allocation6], 0
    %10 = vsyncpa [#allocation4], 0
    // Predicated region
    $region2: #{tpu_custom_call.1} parent=1 // pred_check
      _
    $region3: #{tpu_custom_call.1} parent=1 // pred_check_branch
      %12 = sbr.rel (0) target = $region5
    $region4: #{tpu_custom_call.1} parent=1 // pred_region
      %s14 = ssub.s32 1024, 1024
      %15 = vsyncadd [#allocation3], %s14
      %s16 = sshll.u32 [#allocation2], 4
      %s17 = int_to_ptr.vmem [resolvable:$true] %s16
      %22 = dma.hbm_to_vmem [thread:$0]  %s0, 1024, %s17, [#allocation3], 64, 64, 4
    $region5: #{tpu_custom_call.1} parent=1 // pred_fallthru
      _
    // Predicated region
    $region6: #{tpu_custom_call.1} parent=1 // pred_check
      _
    $region7: #{tpu_custom_call.1} parent=1 // pred_check_branch
      %24 = sbr.rel (0) target = $region9
    $region8: #{tpu_custom_call.1} parent=1 // pred_region
      %s26 = ssub.s32 1024, 1024
      %27 = vsyncadd [#allocation6], %s26
      %s28 = sshll.u32 [#allocation5], 4
      %s29 = int_to_ptr.vmem [resolvable:$true] %s28
      %34 = dma.hbm_to_vmem [thread:$0]  %s1, 1024, %s29, [#allocation6], 64, 64, 4
    $region9: #{tpu_custom_call.1} parent=1 // pred_fallthru
      _
    // Predicated region
    $region10: #{tpu_custom_call.1} parent=1 // pred_check
      _
    $region11: #{tpu_custom_call.1} parent=1 // pred_check_branch
      %36 = sbr.rel (0) target = $region13
    $region12: #{tpu_custom_call.1} parent=1 // pred_region
      _
    $region13: #{tpu_custom_call.1} parent=1 // pred_fallthru
      _
    // Predicated region
    $region14: #{tpu_custom_call.1} parent=1 // pred_check
      _
    $region15: #{tpu_custom_call.1} parent=1 // pred_check_branch
      %38 = sbr.rel (0) target = $region17
    $region16: #{tpu_custom_call.1} parent=1 // pred_region
      %39 = dma.done [#allocation3], 1024
    $region17: #{tpu_custom_call.1} parent=1 // pred_fallthru
      _
    // Predicated region
    $region18: #{tpu_custom_call.1} parent=1 // pred_check
      _
    $region19: #{tpu_custom_call.1} parent=1 // pred_check_branch
      %41 = sbr.rel (0) target = $region21
    $region20: #{tpu_custom_call.1} parent=1 // pred_region
      %42 = dma.done [#allocation6], 1024
    $region21: #{tpu_custom_call.1} parent=1 // pred_fallthru
      _
    %v44 = vld [vmem:[#allocation2] sm:$0xf]
    %v45 = vld [vmem:[#allocation2 + $0x4] sm:$0xf]
    %v46 = vld [vmem:[#allocation2 + $0x8] sm:$0xf]
    %v47 = vld [vmem:[#allocation2 + $0xc] sm:$0xf]
    %v48 = vld [vmem:[#allocation2 + $0x10] sm:$0xf]
    %v49 = vld [vmem:[#allocation2 + $0x14] sm:$0xf]
    %v50 = vld [vmem:[#allocation2 + $0x18] sm:$0xf]
    %v51 = vld [vmem:[#allocation2 + $0x1c] sm:$0xf]
    %v52 = vld [vmem:[#allocation2 + $0x20] sm:$0xf]
    %v53 = vld [vmem:[#allocation2 + $0x24] sm:$0xf]
    %v54 = vld [vmem:[#allocation2 + $0x28] sm:$0xf]
    %v55 = vld [vmem:[#allocation2 + $0x2c] sm:$0xf]
    %v56 = vld [vmem:[#allocation2 + $0x30] sm:$0xf]
    %v57 = vld [vmem:[#allocation2 + $0x34] sm:$0xf]
    %v58 = vld [vmem:[#allocation2 + $0x38] sm:$0xf]
    %v59 = vld [vmem:[#allocation2 + $0x3c] sm:$0xf]
    %v60 = vld [vmem:[#allocation5] sm:$0xf]
    %v61 = vld [vmem:[#allocation5 + $0x4] sm:$0xf]
    %v62 = vld [vmem:[#allocation5 + $0x8] sm:$0xf]
    %v63 = vld [vmem:[#allocation5 + $0xc] sm:$0xf]
    %v64 = vld [vmem:[#allocation5 + $0x10] sm:$0xf]
    %v65 = vld [vmem:[#allocation5 + $0x14] sm:$0xf]
    %v66 = vld [vmem:[#allocation5 + $0x18] sm:$0xf]
    %v67 = vld [vmem:[#allocation5 + $0x1c] sm:$0xf]
    %v68 = vld [vmem:[#allocation5 + $0x20] sm:$0xf]
    %v69 = vld [vmem:[#allocation5 + $0x24] sm:$0xf]
    %v70 = vld [vmem:[#allocation5 + $0x28] sm:$0xf]
    %v71 = vld [vmem:[#allocation5 + $0x2c] sm:$0xf]
    %v72 = vld [vmem:[#allocation5 + $0x30] sm:$0xf]
    %v73 = vld [vmem:[#allocation5 + $0x34] sm:$0xf]
    %v74 = vld [vmem:[#allocation5 + $0x38] sm:$0xf]
    %v75 = vld [vmem:[#allocation5 + $0x3c] sm:$0xf]
    %v76 = vld [vmem:[%s2] sm:$0x1]
    %v78 = vlaneseq
    %v79 = vshrl.u32 %v78, 7
    %v80 = vsub.s32 0, %v79
    %v81 = vrot.slane %v76, %v80
    %v99 = vunpack.c.l.b16 %v44
    %v100 = vunpack.c.l.b16 %v45
    %v101 = vunpack.c.l.b16 %v46
    %v102 = vunpack.c.l.b16 %v47
    %v103 = vunpack.c.l.b16 %v48
    %v104 = vunpack.c.l.b16 %v49
    %v105 = vunpack.c.l.b16 %v50
    %v106 = vunpack.c.l.b16 %v51
    %v107 = vunpack.c.l.b16 %v52
    %v108 = vunpack.c.l.b16 %v53
    %v109 = vunpack.c.l.b16 %v54
    %v110 = vunpack.c.l.b16 %v55
    %v111 = vunpack.c.l.b16 %v56
    %v112 = vunpack.c.l.b16 %v57
    %v113 = vunpack.c.l.b16 %v58
    %v114 = vunpack.c.l.b16 %v59
    %v115 = vpack.c.b16 %v100, %v99
    %v116 = vpack.c.b16 %v102, %v101
    %v117 = vpack.c.b16 %v104, %v103
    %v118 = vpack.c.b16 %v106, %v105
    %v119 = vpack.c.b16 %v108, %v107
    %v120 = vpack.c.b16 %v110, %v109
    %v121 = vpack.c.b16 %v112, %v111
    %v122 = vpack.c.b16 %v114, %v113
    %v147 = vunpack.c.l.b16 %v60
    %v148 = vunpack.c.l.b16 %v61
    %v149 = vunpack.c.l.b16 %v62
    %v150 = vunpack.c.l.b16 %v63
    %v151 = vunpack.c.l.b16 %v64
    %v152 = vunpack.c.l.b16 %v65
    %v153 = vunpack.c.l.b16 %v66
    %v154 = vunpack.c.l.b16 %v67
    %v155 = vunpack.c.l.b16 %v68
    %v156 = vunpack.c.l.b16 %v69
    %v157 = vunpack.c.l.b16 %v70
    %v158 = vunpack.c.l.b16 %v71
    %v159 = vunpack.c.l.b16 %v72
    %v160 = vunpack.c.l.b16 %v73
    %v161 = vunpack.c.l.b16 %v74
    %v162 = vunpack.c.l.b16 %v75
    %v163 = vpack.c.b16 %v148, %v147
    %v164 = vpack.c.b16 %v150, %v149
    %v165 = vpack.c.b16 %v152, %v151
    %v166 = vpack.c.b16 %v154, %v153
    %v167 = vpack.c.b16 %v156, %v155
    %v168 = vpack.c.b16 %v158, %v157
    %v169 = vpack.c.b16 %v160, %v159
    %v170 = vpack.c.b16 %v162, %v161
    %179 = vmatprep.subr.bf16.mxu0 0
    %180 = vmatpush1.bf16.msra.mxu0 %v163
    %181 = vmatprep.subr.bf16.mxu0 0
    %182 = vmatpush1.bf16.msra.mxu0 %v164
    %183 = vmatprep.subr.bf16.mxu0 0
    %184 = vmatpush1.bf16.msra.mxu0 %v165
    %185 = vmatprep.subr.bf16.mxu0 0
    %186 = vmatpush1.bf16.msra.mxu0 %v166
    %187 = vmatprep.subr.bf16.mxu0 0
    %188 = vmatpush1.bf16.msra.mxu0 %v167
    %189 = vmatprep.subr.bf16.mxu0 0
    %190 = vmatpush1.bf16.msra.mxu0 %v168
    %191 = vmatprep.subr.bf16.mxu0 0
    %192 = vmatpush1.bf16.msra.mxu0 %v169
    %193 = vmatprep.subr.bf16.mxu0 0
    %194 = vmatpush1.bf16.msra.mxu0 %v170
    %195 = vmatprep.subr.bf16.mxu0 0
    %196 = vmatpush1.bf16.msra.mxu0 0
    %197 = vmatprep.subr.bf16.mxu0 0
    %198 = vmatpush1.bf16.msra.mxu0 0
    %199 = vmatprep.subr.bf16.mxu0 0
    %200 = vmatpush1.bf16.msra.mxu0 0
    %201 = vmatprep.subr.bf16.mxu0 0
    %202 = vmatpush1.bf16.msra.mxu0 0
    %203 = vmatprep.subr.bf16.mxu0 0
    %204 = vmatpush1.bf16.msra.mxu0 0
    %205 = vmatprep.subr.bf16.mxu0 0
    %206 = vmatpush1.bf16.msra.mxu0 0
    %207 = vmatprep.subr.bf16.mxu0 0
    %208 = vmatpush1.bf16.msra.mxu0 0
    %209 = vmatprep.subr.bf16.mxu0 0
    %210 = vmatpush1.bf16.msra.mxu0 0
    %211 = vmatprep.mubr.bf16.mxu0 0
    %212 = vmatmul.mubr.bf16.gmra.mrb[0].mxu0 %v115
    %v213 = vpop.f32.mrb[0].mxu0
    %v214 = vadd.f32 %v81, %v213
    %v215 = vpop.f32.mrb[0].mxu0
    %v216 = vpop.f32.mrb[0].mxu0
    %v217 = vadd.f32 %v81, %v216
    %v218 = vpop.f32.mrb[0].mxu0
    %219 = vmatprep.mubr.bf16.mxu0 0
    %220 = vmatmul.mubr.bf16.gmra.mrb[0].mxu0 %v116
    %v221 = vpop.f32.mrb[0].mxu0
    %v222 = vadd.f32 %v81, %v221
    %v223 = vpop.f32.mrb[0].mxu0
    %v224 = vpop.f32.mrb[0].mxu0
    %v225 = vadd.f32 %v81, %v224
    %v226 = vpop.f32.mrb[0].mxu0
    %227 = vmatprep.mubr.bf16.mxu0 0
    %228 = vmatmul.mubr.bf16.gmra.mrb[0].mxu0 %v117
    %v229 = vpop.f32.mrb[0].mxu0
    %v230 = vadd.f32 %v81, %v229
    %v231 = vpop.f32.mrb[0].mxu0
    %v232 = vpop.f32.mrb[0].mxu0
    %v233 = vadd.f32 %v81, %v232
    %v234 = vpop.f32.mrb[0].mxu0
    %235 = vmatprep.mubr.bf16.mxu0 0
    %236 = vmatmul.mubr.bf16.gmra.mrb[0].mxu0 %v118
    %v237 = vpop.f32.mrb[0].mxu0
    %v238 = vadd.f32 %v81, %v237
    %v239 = vpop.f32.mrb[0].mxu0
    %v240 = vpop.f32.mrb[0].mxu0
    %v241 = vadd.f32 %v81, %v240
    %v242 = vpop.f32.mrb[0].mxu0
    %243 = vmatprep.mubr.bf16.mxu0 0
    %244 = vmatmul.mubr.bf16.gmra.mrb[0].mxu0 %v119
    %v245 = vpop.f32.mrb[0].mxu0
    %v246 = vadd.f32 %v81, %v245
    %v247 = vpop.f32.mrb[0].mxu0
    %v248 = vpop.f32.mrb[0].mxu0
    %v249 = vadd.f32 %v81, %v248
    %v250 = vpop.f32.mrb[0].mxu0
    %251 = vmatprep.mubr.bf16.mxu0 0
    %252 = vmatmul.mubr.bf16.gmra.mrb[0].mxu0 %v120
    %v253 = vpop.f32.mrb[0].mxu0
    %v254 = vadd.f32 %v81, %v253
    %v255 = vpop.f32.mrb[0].mxu0
    %v256 = vpop.f32.mrb[0].mxu0
    %v257 = vadd.f32 %v81, %v256
    %v258 = vpop.f32.mrb[0].mxu0
    %259 = vmatprep.mubr.bf16.mxu0 0
    %260 = vmatmul.mubr.bf16.gmra.mrb[0].mxu0 %v121
    %v261 = vpop.f32.mrb[0].mxu0
    %v262 = vadd.f32 %v81, %v261
    %v263 = vpop.f32.mrb[0].mxu0
    %v264 = vpop.f32.mrb[0].mxu0
    %v265 = vadd.f32 %v81, %v264
    %v266 = vpop.f32.mrb[0].mxu0
    %267 = vmatprep.mubr.bf16.mxu0 0
    %268 = vmatmul.mubr.bf16.gmra.mrb[0].mxu0 %v122
    %v269 = vpop.f32.mrb[0].mxu0
    %v270 = vadd.f32 %v81, %v269
    %v271 = vpop.f32.mrb[0].mxu0
    %v272 = vpop.f32.mrb[0].mxu0
    %v273 = vadd.f32 %v81, %v272
    %v274 = vpop.f32.mrb[0].mxu0
    %275 = vdwg.mxu0
    %v276 = vtanh.pop %v214
    %v277 = vtanh.pop %v217
    %v278 = vtanh.pop %v222
    %v279 = vtanh.pop %v225
    %v280 = vtanh.pop %v230
    %v281 = vtanh.pop %v233
    %v282 = vtanh.pop %v238
    %v283 = vtanh.pop %v241
    %v284 = vtanh.pop %v246
    %v285 = vtanh.pop %v249
    %v286 = vtanh.pop %v254
    %v287 = vtanh.pop %v257
    %v288 = vtanh.pop %v262
    %v289 = vtanh.pop %v265
    %v290 = vtanh.pop %v270
    %v291 = vtanh.pop %v273
    %292 = vst [vmem:[#allocation7] sm:$0xff] %v276
    %293 = vst [vmem:[#allocation7 + $0x8] sm:$0xff] %v277
    %294 = vst [vmem:[#allocation7 + $0x10] sm:$0xff] %v278
    %295 = vst [vmem:[#allocation7 + $0x18] sm:$0xff] %v279
    %296 = vst [vmem:[#allocation7 + $0x20] sm:$0xff] %v280
    %297 = vst [vmem:[#allocation7 + $0x28] sm:$0xff] %v281
    %298 = vst [vmem:[#allocation7 + $0x30] sm:$0xff] %v282
    %299 = vst [vmem:[#allocation7 + $0x38] sm:$0xff] %v283
    %300 = vst [vmem:[#allocation7 + $0x40] sm:$0xff] %v284
    %301 = vst [vmem:[#allocation7 + $0x48] sm:$0xff] %v285
    %302 = vst [vmem:[#allocation7 + $0x50] sm:$0xff] %v286
    %303 = vst [vmem:[#allocation7 + $0x58] sm:$0xff] %v287
    %304 = vst [vmem:[#allocation7 + $0x60] sm:$0xff] %v288
    %305 = vst [vmem:[#allocation7 + $0x68] sm:$0xff] %v289
    %306 = vst [vmem:[#allocation7 + $0x70] sm:$0xff] %v290
    %307 = vst [vmem:[#allocation7 + $0x78] sm:$0xff] %v291
    // Predicated region
    $region22: #{tpu_custom_call.1} parent=1 // pred_check
      _
    $region23: #{tpu_custom_call.1} parent=1 // pred_check_branch
      %309 = sbr.rel (0) target = $region25
    $region24: #{tpu_custom_call.1} parent=1 // pred_region
      %s311 = ssub.s32 2048, 2048
      %312 = vsyncadd [#allocation4], %s311
      %s313 = sshll.u32 [#allocation7], 4
      %s314 = int_to_ptr.vmem [resolvable:$true] %s313
      %319 = dma.vmem_to_hbm [thread:$0]  %s314, 2048, %s3, [#allocation4], 128, 128, 8
    $region25: #{tpu_custom_call.1} parent=1 // pred_fallthru
      _
    // Predicated region
    $region26: #{tpu_custom_call.1} parent=1 // pred_check
      _
    $region27: #{tpu_custom_call.1} parent=1 // pred_check_branch
      %321 = sbr.rel (0) target = $region29
    $region28: #{tpu_custom_call.1} parent=1 // pred_region
      %322 = dma.done [#allocation4], 2048
    $region29: #{tpu_custom_call.1} parent=1 // pred_fallthru
      _
    %323 = vsyncpa [#allocation3], 1
    %324 = vsyncpa [#allocation6], 1
    %325 = vsyncpa [#allocation4], 1

</llo_original>
